<compile_context>
chip_gen: v6e
topology: v6e:2x2x1
jax: 0.10.0
libtpu: 0.0.40
codegen_flags: <defaults>
</compile_context>

<pallas_src>
import math

import jax
import jax.numpy as jnp
from jax.experimental import pallas as pl
from jax.experimental.pallas import tpu as pltpu


def snn_cell_kernel(spike_ref, init_pm_ref, init_ps_ref, init_reset_ref,
                    wt_ref, dec_ref, nrn_ref,
                    spike_out_ref, v_out_ref, reset_out_ref,
                    pm_out_ref, ps_out_ref):
    """One SNN-cell time step for a (tb, I)/(tb, N) batch tile.

    Grid is (batch_tiles, time).  The psp_m / psp_s / reset state lives in the
    resident output blocks (their index_map ignores the time axis), so across
    the "arbitrary" time axis the state never leaves VMEM; only the per-step
    input-spike tile and output-spike tile move HBM <-> VMEM.
    """
    t = pl.program_id(1)

    @pl.when(t == 0)
    def _():
        # Seed the resident state blocks from the initial state (read once per
        # batch tile; their block index never changes along t).
        pm_out_ref[...] = init_pm_ref[...]
        ps_out_ref[...] = init_ps_ref[...]
        reset_out_ref[...] = init_reset_ref[...]

    spike_in = spike_ref[0]                                   # (tb, I)

    # PSP dynamics (VPU); packed decay rows broadcast over the batch sublanes.
    cur_pm = pm_out_ref[...] * dec_ref[0:1, :] + spike_in
    cur_ps = ps_out_ref[...] * dec_ref[1:2, :] + spike_in

    # Linear layer on the MXU: psp [tb, I] @ (W^T * v_0) [I, N] in bf16,
    # f32 accumulate; bias row already holds bias * v_0.
    psp = (cur_pm - cur_ps).astype(jnp.bfloat16)
    weighted = jnp.dot(psp, wt_ref[...], preferred_element_type=jnp.float32)
    weighted = weighted + nrn_ref[0:1, :]

    prev_reset = reset_out_ref[...]
    cur_v = weighted - prev_reset

    # threshold.forward: max(0, sign(v - 1)) == 1.0 iff v > 1.0 else 0.0.
    out_spike = jnp.where(cur_v > 1.0, 1.0, 0.0)
    cur_reset = prev_reset * nrn_ref[1:2, :] + out_spike * nrn_ref[2:3, :]

    spike_out_ref[0] = out_spike.astype(spike_out_ref.dtype)
    v_out_ref[...] = cur_v.astype(v_out_ref.dtype)
    reset_out_ref[...] = cur_reset
    pm_out_ref[...] = cur_pm
    ps_out_ref[...] = cur_ps


def prepare_params(params):
    """One-time parameter prep, hoisted out of the per-step path.

    * weight transposed once, pre-scaled by v_0 (mathematically identical to
      scaling the linear output), cast to bf16 for the MXU.
    * six per-feature parameter rows packed into two arrays -> 2 DMAs, not 6.
    """
    f32 = jnp.float32
    w = jnp.asarray(params["weight"], f32)                    # [N, I]
    v0 = jnp.asarray(params["v_0"], f32)
    wt = (w.T * v0).astype(jnp.bfloat16)                      # [I, N]
    dec = jnp.stack([jnp.asarray(params["decay_m"], f32),
                     jnp.asarray(params["decay_s"], f32)], axis=0)        # [2, I]
    nrn = jnp.stack([jnp.asarray(params["bias"], f32) * v0,
                     jnp.asarray(params["reset_decay"], f32),
                     jnp.asarray(params["reset_v"], f32)], axis=0)        # [3, N]
    return dict(wt=wt, dec=dec, nrn=nrn)


def _tpu_vmem_capacity(default_bytes=64 * 1024 * 1024):
    """Physical VMEM bytes of the attached chip (conservative v7x default)."""
    try:
        info = pltpu.get_tpu_info()
        cap = getattr(info, "vmem_capacity_bytes", None)
        if cap:
            return int(cap)
    except Exception:
        pass
    return default_bytes


def _pick_batch_tile(batch, input_size, neuron_number, budget_bytes):
    """Largest multiple-of-8 batch tile dividing `batch` under the VMEM budget.

    Per batch tile (all at the default 2 pipeline buffers):
      5 (tb, I) f32 blocks: spike_in, init_pm, init_ps, pm_out, ps_out
      4 (tb, N) f32 blocks: spike_out, init_reset, reset_out, v_out
    plus the grid-invariant bf16 weight and two packed param rows (also counted
    at 2 buffers since they are left at the default pipelining depth).
    Prefers >=2 batch programs (both v7x TensorCores) when tb can stay >=128.
    """
    itemsize = 4
    fixed = 2 * (input_size * neuron_number * 2
                 + 8 * input_size * itemsize + 8 * neuron_number * itemsize)

    def streamed(tb):
        return 2 * (5 * tb * input_size + 4 * tb * neuron_number) * itemsize

    fitting = [tb for tb in (1024, 512, 256, 128, 64, 32, 16, 8)
               if batch % tb == 0 and fixed + streamed(tb) <= budget_bytes]
    if not fitting:
        # TODO(synk): ragged / oversized batches should be padded to a multiple
        # of 8 instead of falling back to one full-batch block (VMEM risk).
        return batch
    for tb in fitting:                       # descending
        if batch // tb >= 2 and tb >= 128:
            return tb
    return fitting[0]


def snn_cell_forward_multistep(spike_seq, prev_states, prepared, *,
                               batch_tile=None):
    """Run `T` snn_cell steps in one fused pallas_call.

    spike_seq: [T, B, input_size] f32
    prev_states: (prev_v [B,N], prev_reset [B,N], prev_psp_m [B,I], prev_psp_s [B,I])
    prepared: output of prepare_params().
    returns (spikes [T, B, N], (final_v, final_reset, final_psp_m, final_psp_s))
    """
    prev_v, prev_reset, prev_psp_m, prev_psp_s = prev_states
    del prev_v  # not used by the forward pass (replaced by current_v)

    T, B, I = spike_seq.shape
    N = prepared["nrn"].shape[1]
    f32 = jnp.float32

    vmem_cap = _tpu_vmem_capacity()
    vmem_limit = int(min(vmem_cap * 0.75, vmem_cap - (8 << 20)))
    if batch_tile is None:
        batch_tile = _pick_batch_tile(B, I, N, budget_bytes=vmem_cap // 2)
    tb = batch_tile
    assert B % tb == 0, f"batch {B} must be divisible by batch tile {tb}"
    grid = (B // tb, T)

    seq_i = pl.BlockSpec((1, tb, I), lambda i, t: (t, i, 0))   # per-step stream
    seq_n = pl.BlockSpec((1, tb, N), lambda i, t: (t, i, 0))
    row_i = pl.BlockSpec((tb, I), lambda i, t: (i, 0))         # resident across t
    row_n = pl.BlockSpec((tb, N), lambda i, t: (i, 0))
    w_spec = pl.BlockSpec((I, N), lambda i, t: (0, 0))         # grid-invariant
    dec_spec = pl.BlockSpec((2, I), lambda i, t: (0, 0))
    nrn_spec = pl.BlockSpec((3, N), lambda i, t: (0, 0))

    out_shapes = (
        jax.ShapeDtypeStruct((T, B, N), f32),   # spikes, all steps
        jax.ShapeDtypeStruct((B, N), f32),      # final membrane potential
        jax.ShapeDtypeStruct((B, N), f32),      # final reset
        jax.ShapeDtypeStruct((B, I), f32),      # final psp_m
        jax.ShapeDtypeStruct((B, I), f32),      # final psp_s
    )

    spikes, fin_v, fin_reset, fin_pm, fin_ps = pl.pallas_call(
        snn_cell_kernel,
        out_shape=out_shapes,
        grid=grid,
        in_specs=[seq_i, row_i, row_i, row_n, w_spec, dec_spec, nrn_spec],
        out_specs=(seq_n, row_n, row_n, row_i, row_i),
        compiler_params=pltpu.CompilerParams(
            dimension_semantics=("parallel", "arbitrary"),
            vmem_limit_bytes=vmem_limit,
        ),
    )(spike_seq, prev_psp_m, prev_psp_s, prev_reset,
      prepared["wt"], prepared["dec"], prepared["nrn"])

    return spikes, (fin_v, fin_reset, fin_pm, fin_ps)


def snn_cell_forward(current_spike, prev_states, prepared, *, batch_tile=None):
    """Single snn_cell forward step (exact module semantics)."""
    spikes, new_states = snn_cell_forward_multistep(
        current_spike[None], prev_states, prepared, batch_tile=batch_tile)
    return spikes[0], new_states


if __name__ == "__main__":
    # Lane-dense toy shapes: last axes multiples of 128, batch multiple of 8.
    batch, input_size, neuron_number, step_num = 16, 128, 128, 4
    tau_m, tau_s = 4.0, 1.0

    # --- parameter init (mirrors snn_cell.__init__) ---
    eta = tau_m / tau_s
    v_0 = (eta ** (eta / (eta - 1.0))) / (eta - 1.0)
    decay_m = jnp.full((input_size,), math.exp(-1.0 / tau_m), jnp.float32)
    decay_s = jnp.full((input_size,), math.exp(-1.0 / tau_s), jnp.float32)
    reset_decay = jnp.full((neuron_number,), math.exp(-1.0 / tau_m), jnp.float32)
    reset_v = jnp.full((neuron_number,), 1.0, jnp.float32)

    key = jax.random.PRNGKey(0)
    kw, kb, ks, kv, kr, km, kp = jax.random.split(key, 7)
    bound = 1.0 / math.sqrt(input_size)  # torch.nn.Linear default init range
    weight = jax.random.uniform(kw, (neuron_number, input_size), jnp.float32,
                                -bound, bound)
    bias = jax.random.uniform(kb, (neuron_number,), jnp.float32, -bound, bound)

    params = dict(weight=weight, bias=bias, decay_m=decay_m, decay_s=decay_s,
                  reset_decay=reset_decay, reset_v=reset_v, v_0=v_0)
    prepared = prepare_params(params)

    # --- example inputs / previous state ---
    spike_seq = (jax.random.uniform(ks, (step_num, batch, input_size)) > 0.7
                 ).astype(jnp.float32)
    prev_v = jax.random.normal(kv, (batch, neuron_number), dtype=jnp.float32)
    prev_reset = jax.random.uniform(kr, (batch, neuron_number), dtype=jnp.float32)
    prev_psp_m = jax.random.normal(km, (batch, input_size), dtype=jnp.float32)
    prev_psp_s = jax.random.normal(kp, (batch, input_size), dtype=jnp.float32)
    states0 = (prev_v, prev_reset, prev_psp_m, prev_psp_s)

    # Fused time-loop kernel; batch_tile=8 -> 2 batch programs so the tiled /
    # megacore path is exercised even at toy size.
    spikes_fused, final_states = snn_cell_forward_multistep(
        spike_seq, states0, prepared, batch_tile=8)
    jax.block_until_ready((spikes_fused,) + final_states)

    # Same kernel driven one step at a time (module-equivalent forward).
    states = states0
    spikes_step = []
    for t in range(step_num):
        s, states = snn_cell_forward(spike_seq[t], states, prepared, batch_tile=8)
        spikes_step.append(s)
    spikes_step = jnp.stack(spikes_step, axis=0)
    jax.block_until_ready((spikes_step,) + states)

    # 1) fused time loop must reproduce running the cell step by step.
    assert jnp.array_equal(spikes_fused, spikes_step), "fused vs stepwise spikes"
    for a, b in zip(final_states, states):
        assert jnp.allclose(a, b, atol=1e-5, rtol=1e-5), "fused vs stepwise state"

    # 2) psp recursion (no matmul involved) must match an f32 reference.
    ref_pm, ref_ps = prev_psp_m, prev_psp_s
    for t in range(step_num):
        ref_pm = ref_pm * decay_m[None, :] + spike_seq[t]
        ref_ps = ref_ps * decay_s[None, :] + spike_seq[t]
    assert jnp.allclose(final_states[2], ref_pm, atol=1e-6), "psp_m mismatch"
    assert jnp.allclose(final_states[3], ref_ps, atol=1e-6), "psp_s mismatch"

    # 3) single-step numerics vs pure-JAX f32 reference (bf16 MXU tolerance).
    spike1, (v1, reset1, pm1, ps1) = snn_cell_forward(
        spike_seq[0], states0, prepared, batch_tile=8)
    r_pm = prev_psp_m * decay_m[None, :] + spike_seq[0]
    r_ps = prev_psp_s * decay_s[None, :] + spike_seq[0]
    r_v = (jnp.dot(r_pm - r_ps, weight.T, precision=jax.lax.Precision.HIGHEST)
           + bias[None, :]) * jnp.float32(v_0) - prev_reset
    assert jnp.allclose(pm1, r_pm, atol=1e-6), "single-step psp_m mismatch"
    assert jnp.allclose(ps1, r_ps, atol=1e-6), "single-step psp_s mismatch"
    assert jnp.allclose(v1, r_v, atol=1e-1, rtol=2e-2), "membrane potential mismatch"
    # Threshold is discontinuous; validate spike / reset against the kernel's
    # own membrane potential (prev_reset is NOT donated, so reading it is safe).
    exp_spike = (v1 > 1.0).astype(jnp.float32)
    exp_reset = prev_reset * reset_decay[None, :] + exp_spike * reset_v[None, :]
    assert jnp.array_equal(spike1, exp_spike), "spike mismatch"
    assert jnp.allclose(reset1, exp_reset, atol=1e-6), "reset mismatch"

    print("KERNEL_OK")
</pallas_src>

<mosaic_0001>
module attributes {stable_mosaic.version = 11 : i64} {
  func.func @snn_cell_kernel(%arg0: i32, %arg1: i32, %arg2: memref<1x8x128xf32, #tpu.memory_space<vmem>>, %arg3: memref<8x128xf32, #tpu.memory_space<vmem>>, %arg4: memref<8x128xf32, #tpu.memory_space<vmem>>, %arg5: memref<8x128xf32, #tpu.memory_space<vmem>>, %arg6: memref<128x128xbf16, #tpu.memory_space<vmem>>, %arg7: memref<2x128xf32, #tpu.memory_space<vmem>>, %arg8: memref<3x128xf32, #tpu.memory_space<vmem>>, %arg9: memref<1x8x128xf32, #tpu.memory_space<vmem>>, %arg10: memref<8x128xf32, #tpu.memory_space<vmem>>, %arg11: memref<8x128xf32, #tpu.memory_space<vmem>>, %arg12: memref<8x128xf32, #tpu.memory_space<vmem>>, %arg13: memref<8x128xf32, #tpu.memory_space<vmem>>) attributes {dimension_semantics = [#tpu.dimension_semantics<parallel>, #tpu.dimension_semantics<arbitrary>], iteration_bounds = array<i64: 2, 4>, scalar_prefetch = 0 : i64, scratch_operands = 0 : i64, tpu.core_type = #tpu.core_type<tc>, window_params = [{transform_indices = @transform_0, window_bounds = array<i64: 1, 8, 128>}, {transform_indices = @transform_1, window_bounds = array<i64: 8, 128>}, {transform_indices = @transform_2, window_bounds = array<i64: 8, 128>}, {transform_indices = @transform_3, window_bounds = array<i64: 8, 128>}, {pipeline_mode = #tpu.pipeline_mode<synchronous>, transform_indices = @transform_4, window_bounds = array<i64: 128, 128>}, {pipeline_mode = #tpu.pipeline_mode<synchronous>, transform_indices = @transform_5, window_bounds = array<i64: 2, 128>}, {pipeline_mode = #tpu.pipeline_mode<synchronous>, transform_indices = @transform_6, window_bounds = array<i64: 3, 128>}, {transform_indices = @transform_7, window_bounds = array<i64: 1, 8, 128>}, {transform_indices = @transform_8, window_bounds = array<i64: 8, 128>}, {transform_indices = @transform_9, window_bounds = array<i64: 8, 128>}, {transform_indices = @transform_10, window_bounds = array<i64: 8, 128>}, {transform_indices = @transform_11, window_bounds = array<i64: 8, 128>}]} {
    %c0_i32 = arith.constant 0 : i32
    %0 = arith.cmpi eq, %arg1, %c0_i32 : i32
    %1 = arith.extui %0 : i1 to i32
    %c0_i32_0 = arith.constant 0 : i32
    %2 = arith.cmpi ne, %1, %c0_i32_0 : i32
    scf.if %2 {
      %c0_33 = arith.constant 0 : index
      %c0_34 = arith.constant 0 : index
      %43 = vector.load %arg3[%c0_33, %c0_34] : memref<8x128xf32, #tpu.memory_space<vmem>>, vector<8x128xf32>
      %c0_35 = arith.constant 0 : index
      %c0_36 = arith.constant 0 : index
      %44 = vector.load %arg12[%c0_35, %c0_36] : memref<8x128xf32, #tpu.memory_space<vmem>>, vector<8x128xf32>
      tpu.vector_store %arg12[%c0_35, %c0_36], %43 {strides = array<i32>} : memref<8x128xf32, #tpu.memory_space<vmem>>, vector<8x128xf32>,
      %c0_37 = arith.constant 0 : index
      %c0_38 = arith.constant 0 : index
      %45 = vector.load %arg4[%c0_37, %c0_38] : memref<8x128xf32, #tpu.memory_space<vmem>>, vector<8x128xf32>
      %c0_39 = arith.constant 0 : index
      %c0_40 = arith.constant 0 : index
      %46 = vector.load %arg13[%c0_39, %c0_40] : memref<8x128xf32, #tpu.memory_space<vmem>>, vector<8x128xf32>
      tpu.vector_store %arg13[%c0_39, %c0_40], %45 {strides = array<i32>} : memref<8x128xf32, #tpu.memory_space<vmem>>, vector<8x128xf32>,
      %c0_41 = arith.constant 0 : index
      %c0_42 = arith.constant 0 : index
      %47 = vector.load %arg5[%c0_41, %c0_42] : memref<8x128xf32, #tpu.memory_space<vmem>>, vector<8x128xf32>
      %c0_43 = arith.constant 0 : index
      %c0_44 = arith.constant 0 : index
      %48 = vector.load %arg11[%c0_43, %c0_44] : memref<8x128xf32, #tpu.memory_space<vmem>>, vector<8x128xf32>
      tpu.vector_store %arg11[%c0_43, %c0_44], %47 {strides = array<i32>} : memref<8x128xf32, #tpu.memory_space<vmem>>, vector<8x128xf32>,
    } else {
    }
    %c0 = arith.constant 0 : index
    %c0_1 = arith.constant 0 : index
    %c0_2 = arith.constant 0 : index
    %3 = vector.load %arg2[%c0, %c0_1, %c0_2] : memref<1x8x128xf32, #tpu.memory_space<vmem>>, vector<1x8x128xf32>
    %4 = vector.shape_cast %3 : vector<1x8x128xf32> to vector<8x128xf32>
    %c0_3 = arith.constant 0 : index
    %c0_4 = arith.constant 0 : index
    %5 = vector.load %arg12[%c0_3, %c0_4] : memref<8x128xf32, #tpu.memory_space<vmem>>, vector<8x128xf32>
    %c0_5 = arith.constant 0 : index
    %c0_6 = arith.constant 0 : index
    %6 = vector.load %arg7[%c0_5, %c0_6] : memref<2x128xf32, #tpu.memory_space<vmem>>, vector<1x128xf32>
    %7 = vector.broadcast %6 : vector<1x128xf32> to vector<8x128xf32>
    %8 = arith.mulf %5, %7 : vector<8x128xf32>
    %9 = arith.addf %8, %4 : vector<8x128xf32>
    %c0_7 = arith.constant 0 : index
    %c0_8 = arith.constant 0 : index
    %10 = vector.load %arg13[%c0_7, %c0_8] : memref<8x128xf32, #tpu.memory_space<vmem>>, vector<8x128xf32>
    %c1 = arith.constant 1 : index
    %c0_9 = arith.constant 0 : index
    %11 = vector.load %arg7[%c1, %c0_9] : memref<2x128xf32, #tpu.memory_space<vmem>>, vector<1x128xf32>
    %12 = vector.broadcast %11 : vector<1x128xf32> to vector<8x128xf32>
    %13 = arith.mulf %10, %12 : vector<8x128xf32>
    %14 = arith.addf %13, %4 : vector<8x128xf32>
    %15 = arith.subf %9, %14 : vector<8x128xf32>
    %16 = arith.truncf %15 : vector<8x128xf32> to vector<8x128xbf16>
    %c0_10 = arith.constant 0 : index
    %c0_11 = arith.constant 0 : index
    %17 = vector.load %arg6[%c0_10, %c0_11] : memref<128x128xbf16, #tpu.memory_space<vmem>>, vector<128x128xbf16>
    %cst = arith.constant dense<0.000000e+00> : vector<8x128xf32>
    %18 = tpu.matmul %16, %17, %cst {dimension_numbers = #tpu.dot_dimension_numbers<[1], [0], [0], [1], [0, 0, 1, 1], [], []>} : vector<8x128xbf16>, vector<128x128xbf16>, vector<8x128xf32> -> vector<8x128xf32>
    %c0_12 = arith.constant 0 : index
    %c0_13 = arith.constant 0 : index
    %19 = vector.load %arg8[%c0_12, %c0_13] : memref<3x128xf32, #tpu.memory_space<vmem>>, vector<1x128xf32>
    %20 = vector.broadcast %19 : vector<1x128xf32> to vector<8x128xf32>
    %21 = arith.addf %18, %20 : vector<8x128xf32>
    %c0_14 = arith.constant 0 : index
    %c0_15 = arith.constant 0 : index
    %22 = vector.load %arg11[%c0_14, %c0_15] : memref<8x128xf32, #tpu.memory_space<vmem>>, vector<8x128xf32>
    %23 = arith.subf %21, %22 : vector<8x128xf32>
    %cst_16 = arith.constant 1.000000e+00 : f32
    %24 = vector.broadcast %cst_16 : f32 to vector<8x128xf32>
    %25 = arith.cmpf ogt, %23, %24 : vector<8x128xf32>
    %cst_17 = arith.constant 1.000000e+00 : f32
    %cst_18 = arith.constant 0.000000e+00 : f32
    %26 = vector.broadcast %cst_17 : f32 to vector<8x128xf32>
    %27 = vector.broadcast %cst_18 : f32 to vector<8x128xf32>
    %28 = arith.select %25, %26, %27 : vector<8x128xi1>, vector<8x128xf32>
    %c1_19 = arith.constant 1 : index
    %c0_20 = arith.constant 0 : index
    %29 = vector.load %arg8[%c1_19, %c0_20] : memref<3x128xf32, #tpu.memory_space<vmem>>, vector<1x128xf32>
    %30 = vector.broadcast %29 : vector<1x128xf32> to vector<8x128xf32>
    %31 = arith.mulf %22, %30 : vector<8x128xf32>
    %c2 = arith.constant 2 : index
    %c0_21 = arith.constant 0 : index
    %32 = vector.load %arg8[%c2, %c0_21] : memref<3x128xf32, #tpu.memory_space<vmem>>, vector<1x128xf32>
    %33 = vector.broadcast %32 : vector<1x128xf32> to vector<8x128xf32>
    %34 = arith.mulf %28, %33 : vector<8x128xf32>
    %35 = arith.addf %31, %34 : vector<8x128xf32>
    %c0_22 = arith.constant 0 : index
    %c0_23 = arith.constant 0 : index
    %c0_24 = arith.constant 0 : index
    %36 = vector.load %arg9[%c0_22, %c0_23, %c0_24] : memref<1x8x128xf32, #tpu.memory_space<vmem>>, vector<1x8x128xf32>
    %37 = vector.shape_cast %36 : vector<1x8x128xf32> to vector<8x128xf32>
    %38 = vector.shape_cast %28 : vector<8x128xf32> to vector<1x8x128xf32>
    tpu.vector_store %arg9[%c0_22, %c0_23, %c0_24], %38 {strides = array<i32>} : memref<1x8x128xf32, #tpu.memory_space<vmem>>, vector<1x8x128xf32>,
    %c0_25 = arith.constant 0 : index
    %c0_26 = arith.constant 0 : index
    %39 = vector.load %arg10[%c0_25, %c0_26] : memref<8x128xf32, #tpu.memory_space<vmem>>, vector<8x128xf32>
    tpu.vector_store %arg10[%c0_25, %c0_26], %23 {strides = array<i32>} : memref<8x128xf32, #tpu.memory_space<vmem>>, vector<8x128xf32>,
    %c0_27 = arith.constant 0 : index
    %c0_28 = arith.constant 0 : index
    %40 = vector.load %arg11[%c0_27, %c0_28] : memref<8x128xf32, #tpu.memory_space<vmem>>, vector<8x128xf32>
    tpu.vector_store %arg11[%c0_27, %c0_28], %35 {strides = array<i32>} : memref<8x128xf32, #tpu.memory_space<vmem>>, vector<8x128xf32>,
    %c0_29 = arith.constant 0 : index
    %c0_30 = arith.constant 0 : index
    %41 = vector.load %arg12[%c0_29, %c0_30] : memref<8x128xf32, #tpu.memory_space<vmem>>, vector<8x128xf32>
    tpu.vector_store %arg12[%c0_29, %c0_30], %9 {strides = array<i32>} : memref<8x128xf32, #tpu.memory_space<vmem>>, vector<8x128xf32>,
    %c0_31 = arith.constant 0 : index
    %c0_32 = arith.constant 0 : index
    %42 = vector.load %arg13[%c0_31, %c0_32] : memref<8x128xf32, #tpu.memory_space<vmem>>, vector<8x128xf32>
    tpu.vector_store %arg13[%c0_31, %c0_32], %14 {strides = array<i32>} : memref<8x128xf32, #tpu.memory_space<vmem>>, vector<8x128xf32>,
    return
  }
  func.func @transform_0(%arg0: i32, %arg1: i32) -> (i32, i32, i32) {
    %c0_i32 = arith.constant 0 : i32
    %c0_i32_0 = arith.constant 0 : i32
    return %arg1, %arg0, %c0_i32 : i32, i32, i32
  }
  func.func @transform_1(%arg0: i32, %arg1: i32) -> (i32, i32) {
    %c0_i32 = arith.constant 0 : i32
    %c0_i32_0 = arith.constant 0 : i32
    return %arg0, %c0_i32 : i32, i32
  }
  func.func @transform_2(%arg0: i32, %arg1: i32) -> (i32, i32) {
    %c0_i32 = arith.constant 0 : i32
    %c0_i32_0 = arith.constant 0 : i32
    return %arg0, %c0_i32 : i32, i32
  }
  func.func @transform_3(%arg0: i32, %arg1: i32) -> (i32, i32) {
    %c0_i32 = arith.constant 0 : i32
    %c0_i32_0 = arith.constant 0 : i32
    return %arg0, %c0_i32 : i32, i32
  }
  func.func @transform_4(%arg0: i32, %arg1: i32) -> (i32, i32) {
    %c0_i32 = arith.constant 0 : i32
    %c0_i32_0 = arith.constant 0 : i32
    %c0_i32_1 = arith.constant 0 : i32
    return %c0_i32, %c0_i32_0 : i32, i32
  }
  func.func @transform_5(%arg0: i32, %arg1: i32) -> (i32, i32) {
    %c0_i32 = arith.constant 0 : i32
    %c0_i32_0 = arith.constant 0 : i32
    %c0_i32_1 = arith.constant 0 : i32
    return %c0_i32, %c0_i32_0 : i32, i32
  }
  func.func @transform_6(%arg0: i32, %arg1: i32) -> (i32, i32) {
    %c0_i32 = arith.constant 0 : i32
    %c0_i32_0 = arith.constant 0 : i32
    %c0_i32_1 = arith.constant 0 : i32
    return %c0_i32, %c0_i32_0 : i32, i32
  }
  func.func @transform_7(%arg0: i32, %arg1: i32) -> (i32, i32, i32) {
    %c0_i32 = arith.constant 0 : i32
    %c0_i32_0 = arith.constant 0 : i32
    return %arg1, %arg0, %c0_i32 : i32, i32, i32
  }
  func.func @transform_8(%arg0: i32, %arg1: i32) -> (i32, i32) {
    %c0_i32 = arith.constant 0 : i32
    %c0_i32_0 = arith.constant 0 : i32
    return %arg0, %c0_i32 : i32, i32
  }
  func.func @transform_9(%arg0: i32, %arg1: i32) -> (i32, i32) {
    %c0_i32 = arith.constant 0 : i32
    %c0_i32_0 = arith.constant 0 : i32
    return %arg0, %c0_i32 : i32, i32
  }
  func.func @transform_10(%arg0: i32, %arg1: i32) -> (i32, i32) {
    %c0_i32 = arith.constant 0 : i32
    %c0_i32_0 = arith.constant 0 : i32
    return %arg0, %c0_i32 : i32, i32
  }
  func.func @transform_11(%arg0: i32, %arg1: i32) -> (i32, i32) {
    %c0_i32 = arith.constant 0 : i32
    %c0_i32_0 = arith.constant 0 : i32
    return %arg0, %c0_i32 : i32, i32
  }
}

</mosaic_0001>

<llo_original>
// kernel: tpu_custom_call.1
$region0: #{tpu_custom_call.1}
  #allocation0 [shape = 'u32[]', space=smem, size = 0x4, offset = 0x4, fixed_abs, tag = 'smem constant byte address 0x4 - core index']
  #allocation1 [shape = 'u32[144,128]{1,0:T(1,128)}', space=vmem, size = 0x12000, scoped, tag = 'internal scratch']
  %s0 = inlined_call_operand.hbm [shape: f32[4,16,128], index: 0, kind: input, shape index: {}]
  %s1 = inlined_call_operand.hbm [shape: f32[16,128], index: 1, kind: input, shape index: {}]
  %s2 = inlined_call_operand.hbm [shape: f32[16,128], index: 2, kind: input, shape index: {}]
  %s3 = inlined_call_operand.hbm [shape: f32[16,128], index: 3, kind: input, shape index: {}]
  %s4 = inlined_call_operand.hbm [shape: bf16[128,128], index: 4, kind: input, shape index: {}]
  %s5 = inlined_call_operand.vmem [shape: f32[2,128], index: 5, kind: input, shape index: {}]
  %s6 = inlined_call_operand.vmem [shape: f32[3,128], index: 6, kind: input, shape index: {}]
  %s7 = inlined_call_operand.hbm [shape: f32[4,16,128], index: 7, kind: output, shape index: {0}]
  %s8 = inlined_call_operand.hbm [shape: f32[16,128], index: 8, kind: output, shape index: {1}]
  %s9 = inlined_call_operand.hbm [shape: f32[16,128], index: 9, kind: output, shape index: {2}]
  %s10 = inlined_call_operand.hbm [shape: f32[16,128], index: 10, kind: output, shape index: {3}]
  %s11 = inlined_call_operand.hbm [shape: f32[16,128], index: 11, kind: output, shape index: {4}]
  %12 = xla_tuple %s7, %s8, %s9, %s10, %s11
  %s13 = sld [smem:[#allocation0]]
  $region117: #{tpu_custom_call.1} parent=0
    _
  %s15 = ssub.s32 1, %s13
  %s16 = scalar_select 0, %s15, %s13
  $region1: #{tpu_custom_call.1} parent=0
    #allocation2 [shape = 'u8[8192]{0}', space=vmem, size = 0x2000, scoped, tag = 'input window, operand 0']
    #allocation3 [shape = 's32[2]{0}', space=sflag, size = 0x8, scoped, tag = 'scoped memory for tpu_custom_call.1']
    #allocation4 [shape = 's32[2]{0}', space=sflag, size = 0x8, scoped, tag = 'scoped memory for tpu_custom_call.1']
    #allocation5 [shape = 'u8[8192]{0}', space=vmem, size = 0x2000, scoped, tag = 'input window, operand 1']
    #allocation6 [shape = 's32[2]{0}', space=sflag, size = 0x8, scoped, tag = 'scoped memory for tpu_custom_call.1']
    #allocation7 [shape = 'u8[8192]{0}', space=vmem, size = 0x2000, scoped, tag = 'input window, operand 2']
    #allocation8 [shape = 'u8[8192]{0}', space=vmem, size = 0x2000, scoped, tag = 'input window, operand 3']
    #allocation9 [shape = 's32[2]{0}', space=sflag, size = 0x8, scoped, tag = 'scoped memory for tpu_custom_call.1']
    #allocation10 [shape = 'u8[32768]{0}', space=vmem, size = 0x8000, scoped, tag = 'input window, operand 4, single buffered']
    #allocation11 [shape = 'u8[8192]{0}', space=vmem, size = 0x2000, scoped, tag = 'output window, operand 0']
    #allocation12 [shape = 'u8[8192]{0}', space=vmem, size = 0x2000, scoped, tag = 'output window, operand 1']
    #allocation13 [shape = 's32[2]{0}', space=sflag, size = 0x8, scoped, tag = 'scoped memory for tpu_custom_call.1']
    #allocation14 [shape = 'u8[8192]{0}', space=vmem, size = 0x2000, scoped, tag = 'output window, operand 2']
    #allocation15 [shape = 'u8[8192]{0}', space=vmem, size = 0x2000, scoped, tag = 'output window, operand 3']
    #allocation16 [shape = 's32[2]{0}', space=sflag, size = 0x8, scoped, tag = 'scoped memory for tpu_custom_call.1']
    #allocation17 [shape = 'u8[8192]{0}', space=vmem, size = 0x2000, scoped, tag = 'output window, operand 4']
    %17 = vsyncpa [#allocation3], 0
    %s18 = scalar_lea.sflag [#allocation3], 1
    %19 = vsyncpa %s18, 0
    %20 = vsyncpa [#allocation6], 0
    %s21 = scalar_lea.sflag [#allocation6], 1
    %22 = vsyncpa %s21, 0
    %23 = vsyncpa [#allocation9], 0
    %s24 = scalar_lea.sflag [#allocation9], 1
    %25 = vsyncpa %s24, 0
    %26 = vsyncpa [#allocation4], 0
    %s27 = scalar_lea.sflag [#allocation4], 1
    %28 = vsyncpa %s27, 0
    %29 = vsyncpa [#allocation13], 0
    %s30 = scalar_lea.sflag [#allocation13], 1
    %31 = vsyncpa %s30, 0
    %32 = vsyncpa [#allocation16], 0
    %s33 = scalar_lea.sflag [#allocation16], 1
    %34 = vsyncpa %s33, 0
    loop: start=0, step=1, limit=10
    $region2: #{tpu_custom_call.1} parent=1 // loop_pre_header
      _
    $region3: #{tpu_custom_call.1} parent=1 // loop_header
      %s36 = sphi 0, %s40
      %p37 = scmp.ge.s32.totalorder %s36, 10
      %s43 = sphi 0, %s55
      %s44 = sphi 0, %s51
      %s45 = sphi 0, %s43
      %s46 = sphi 0, %s44
      %s47 = sphi 0, %s45
      %s48 = sphi 0, %s46
      %s60 = sphi 0, %s62
      %s63 = sphi 0, %s60
      %s64 = sphi 0, %s63
      %s80 = sphi 0, %s64
      %s86 = sphi 0, %s88
      %s89 = sphi 0, %s86
      %s90 = sphi 0, %s89
      %s106 = sphi 0, %s90
      %s112 = sphi 0, %s114
      %s115 = sphi 0, %s112
      %s116 = sphi 0, %s115
      %s132 = sphi 0, %s116
      %s138 = sphi 0, %s140
      %s141 = sphi 0, %s138
      %s142 = sphi 0, %s141
      %s158 = sphi 0, %s142
      %s162 = sphi 0, %s162
      %s164 = sphi 0, %s162
      %s165 = sphi 0, %s164
      %s179 = sphi 0, %s165
      %s183 = sphi 0, %s183
      %s185 = sphi 0, %s183
      %s186 = sphi 0, %s185
      %s200 = sphi 0, %s186
      %s204 = sphi 0, %s204
      %s206 = sphi 0, %s204
      %s207 = sphi 0, %s206
      %s221 = sphi 0, %s207
      %s229 = sphi 0, %s231
      %s232 = sphi 0, %s229
      %s233 = sphi 0, %s232
      %s249 = sphi 0, %s233
      %s255 = sphi 0, %s257
      %s258 = sphi 0, %s255
      %s259 = sphi 0, %s258
      %s275 = sphi 0, %s259
      %s281 = sphi 0, %s283
      %s284 = sphi 0, %s281
      %s285 = sphi 0, %s284
      %s301 = sphi 0, %s285
      %s307 = sphi 0, %s309
      %s310 = sphi 0, %s307
      %s311 = sphi 0, %s310
      %s327 = sphi 0, %s311
      %s333 = sphi 0, %s335
      %s336 = sphi 0, %s333
      %s337 = sphi 0, %s336
      %s353 = sphi 0, %s337
    $region4: #{tpu_custom_call.1} parent=1 // loop_header_branch
      %39 = sbr.rel (%p37) target = $region8
    $region5: #{tpu_custom_call.1} parent=1 // loop_body
      %s41 = ssub.s32 %s36, 1
      %s42 = ssub.s32 %s36, 2
      %s49 = sadd.s32 1, %s44
      %p50 = scmp.ge.s32.totalorder %s49, 4
      %s51 = scalar_select %p50, 0, %s49
      %s52 = sadd.s32 1, %s43
      %s53 = scalar_select %p50, %s52, %s43
      %p54 = scmp.ge.s32.totalorder %s53, 2
      %s55 = scalar_select %p54, 0, %s53
      %s56 = ssub.s32 %s44, %s51
      %s57 = ssub.s32 %s43, %s55
      %s58 = sor.u32 %s56, %s57
      %p59 = scmp.eq.s32.totalorder %s58, 0
      %s61 = sadd.s32 %s60, 1
      %s62 = scalar_select %p59, %s60, %s61
      %p65 = pneg %p59
      %p66 = scmp.eq.s32.totalorder %s36, 7
      %p67 = por %p65, %p66
      %p68 = scmp.ne.s32.totalorder %s60, %s63
      %p69 = scmp.eq.s32.totalorder %s36, 0
      %p70 = por %p68, %p69
      %p71 = scmp.ne.s32.totalorder %s60, %s63
      %p72 = scmp.eq.s32.totalorder %s41, 7
      %p73 = por %p71, %p72
      %p74 = scmp.ne.s32.totalorder %s63, %s64
      %p75 = scmp.eq.s32.totalorder %s41, 0
      %p76 = por %p74, %p75
      %p77 = scmp.ne.s32.totalorder %s63, %s64
      %p78 = scmp.eq.s32.totalorder %s42, 7
      %p79 = por %p77, %p78
      %p81 = scmp.ne.s32.totalorder %s64, %s80
      %p82 = scmp.eq.s32.totalorder %s42, 0
      %p83 = por %p81, %p82
      %s84 = ssub.s32 %s43, %s55
      %p85 = scmp.eq.s32.totalorder %s84, 0
      %s87 = sadd.s32 %s86, 1
      %s88 = scalar_select %p85, %s86, %s87
      %p91 = pneg %p85
      %p92 = scmp.eq.s32.totalorder %s36, 7
      %p93 = por %p91, %p92
      %p94 = scmp.ne.s32.totalorder %s86, %s89
      %p95 = scmp.eq.s32.totalorder %s36, 0
      %p96 = por %p94, %p95
      %p97 = scmp.ne.s32.totalorder %s86, %s89
      %p98 = scmp.eq.s32.totalorder %s41, 7
      %p99 = por %p97, %p98
      %p100 = scmp.ne.s32.totalorder %s89, %s90
      %p101 = scmp.eq.s32.totalorder %s41, 0
      %p102 = por %p100, %p101
      %p103 = scmp.ne.s32.totalorder %s89, %s90
      %p104 = scmp.eq.s32.totalorder %s42, 7
      %p105 = por %p103, %p104
      %p107 = scmp.ne.s32.totalorder %s90, %s106
      %p108 = scmp.eq.s32.totalorder %s42, 0
      %p109 = por %p107, %p108
      %s110 = ssub.s32 %s43, %s55
      %p111 = scmp.eq.s32.totalorder %s110, 0
      %s113 = sadd.s32 %s112, 1
      %s114 = scalar_select %p111, %s112, %s113
      %p117 = pneg %p111
      %p118 = scmp.eq.s32.totalorder %s36, 7
      %p119 = por %p117, %p118
      %p120 = scmp.ne.s32.totalorder %s112, %s115
      %p121 = scmp.eq.s32.totalorder %s36, 0
      %p122 = por %p120, %p121
      %p123 = scmp.ne.s32.totalorder %s112, %s115
      %p124 = scmp.eq.s32.totalorder %s41, 7
      %p125 = por %p123, %p124
      %p126 = scmp.ne.s32.totalorder %s115, %s116
      %p127 = scmp.eq.s32.totalorder %s41, 0
      %p128 = por %p126, %p127
      %p129 = scmp.ne.s32.totalorder %s115, %s116
      %p130 = scmp.eq.s32.totalorder %s42, 7
      %p131 = por %p129, %p130
      %p133 = scmp.ne.s32.totalorder %s116, %s132
      %p134 = scmp.eq.s32.totalorder %s42, 0
      %p135 = por %p133, %p134
      %s136 = ssub.s32 %s43, %s55
      %p137 = scmp.eq.s32.totalorder %s136, 0
      %s139 = sadd.s32 %s138, 1
      %s140 = scalar_select %p137, %s138, %s139
      %p143 = pneg %p137
      %p144 = scmp.eq.s32.totalorder %s36, 7
      %p145 = por %p143, %p144
      %p146 = scmp.ne.s32.totalorder %s138, %s141
      %p147 = scmp.eq.s32.totalorder %s36, 0
      %p148 = por %p146, %p147
      %p149 = scmp.ne.s32.totalorder %s138, %s141
      %p150 = scmp.eq.s32.totalorder %s41, 7
      %p151 = por %p149, %p150
      %p152 = scmp.ne.s32.totalorder %s141, %s142
      %p153 = scmp.eq.s32.totalorder %s41, 0
      %p154 = por %p152, %p153
      %p155 = scmp.ne.s32.totalorder %s141, %s142
      %p156 = scmp.eq.s32.totalorder %s42, 7
      %p157 = por %p155, %p156
      %p159 = scmp.ne.s32.totalorder %s142, %s158
      %p160 = scmp.eq.s32.totalorder %s42, 0
      %p161 = por %p159, %p160
      %s163 = sadd.s32 %s162, 1
      %p166 = scmp.eq.s32.totalorder %s36, 7
      %p167 = scmp.ne.s32.totalorder %s162, %s164
      %p168 = scmp.eq.s32.totalorder %s36, 0
      %p169 = por %p167, %p168
      %p170 = scmp.ne.s32.totalorder %s162, %s164
      %p171 = scmp.eq.s32.totalorder %s41, 7
      %p172 = por %p170, %p171
      %p173 = scmp.ne.s32.totalorder %s164, %s165
      %p174 = scmp.eq.s32.totalorder %s41, 0
      %p175 = por %p173, %p174
      %p176 = scmp.ne.s32.totalorder %s164, %s165
      %p177 = scmp.eq.s32.totalorder %s42, 7
      %p178 = por %p176, %p177
      %p180 = scmp.ne.s32.totalorder %s165, %s179
      %p181 = scmp.eq.s32.totalorder %s42, 0
      %p182 = por %p180, %p181
      %s184 = sadd.s32 %s183, 1
      %p187 = scmp.eq.s32.totalorder %s36, 7
      %p188 = scmp.ne.s32.totalorder %s183, %s185
      %p189 = scmp.eq.s32.totalorder %s36, 0
      %p190 = por %p188, %p189
      %p191 = scmp.ne.s32.totalorder %s183, %s185
      %p192 = scmp.eq.s32.totalorder %s41, 7
      %p193 = por %p191, %p192
      %p194 = scmp.ne.s32.totalorder %s185, %s186
      %p195 = scmp.eq.s32.totalorder %s41, 0
      %p196 = por %p194, %p195
      %p197 = scmp.ne.s32.totalorder %s185, %s186
      %p198 = scmp.eq.s32.totalorder %s42, 7
      %p199 = por %p197, %p198
      %p201 = scmp.ne.s32.totalorder %s186, %s200
      %p202 = scmp.eq.s32.totalorder %s42, 0
      %p203 = por %p201, %p202
      %s205 = sadd.s32 %s204, 1
      %p208 = scmp.eq.s32.totalorder %s36, 7
      %p209 = scmp.ne.s32.totalorder %s204, %s206
      %p210 = scmp.eq.s32.totalorder %s36, 0
      %p211 = por %p209, %p210
      %p212 = scmp.ne.s32.totalorder %s204, %s206
      %p213 = scmp.eq.s32.totalorder %s41, 7
      %p214 = por %p212, %p213
      %p215 = scmp.ne.s32.totalorder %s206, %s207
      %p216 = scmp.eq.s32.totalorder %s41, 0
      %p217 = por %p215, %p216
      %p218 = scmp.ne.s32.totalorder %s206, %s207
      %p219 = scmp.eq.s32.totalorder %s42, 7
      %p220 = por %p218, %p219
      %p222 = scmp.ne.s32.totalorder %s207, %s221
      %p223 = scmp.eq.s32.totalorder %s42, 0
      %p224 = por %p222, %p223
      %s225 = ssub.s32 %s44, %s51
      %s226 = ssub.s32 %s43, %s55
      %s227 = sor.u32 %s225, %s226
      %p228 = scmp.eq.s32.totalorder %s227, 0
      %s230 = sadd.s32 %s229, 1
      %s231 = scalar_select %p228, %s229, %s230
      %p234 = pneg %p228
      %p235 = scmp.eq.s32.totalorder %s36, 7
      %p236 = por %p234, %p235
      %p237 = scmp.ne.s32.totalorder %s229, %s232
      %p238 = scmp.eq.s32.totalorder %s36, 0
      %p239 = por %p237, %p238
      %p240 = scmp.ne.s32.totalorder %s229, %s232
      %p241 = scmp.eq.s32.totalorder %s41, 7
      %p242 = por %p240, %p241
      %p243 = scmp.ne.s32.totalorder %s232, %s233
      %p244 = scmp.eq.s32.totalorder %s41, 0
      %p245 = por %p243, %p244
      %p246 = scmp.ne.s32.totalorder %s232, %s233
      %p247 = scmp.eq.s32.totalorder %s42, 7
      %p248 = por %p246, %p247
      %p250 = scmp.ne.s32.totalorder %s233, %s249
      %p251 = scmp.eq.s32.totalorder %s42, 0
      %p252 = por %p250, %p251
      %s253 = ssub.s32 %s43, %s55
      %p254 = scmp.eq.s32.totalorder %s253, 0
      %s256 = sadd.s32 %s255, 1
      %s257 = scalar_select %p254, %s255, %s256
      %p260 = pneg %p254
      %p261 = scmp.eq.s32.totalorder %s36, 7
      %p262 = por %p260, %p261
      %p263 = scmp.ne.s32.totalorder %s255, %s258
      %p264 = scmp.eq.s32.totalorder %s36, 0
      %p265 = por %p263, %p264
      %p266 = scmp.ne.s32.totalorder %s255, %s258
      %p267 = scmp.eq.s32.totalorder %s41, 7
      %p268 = por %p266, %p267
      %p269 = scmp.ne.s32.totalorder %s258, %s259
      %p270 = scmp.eq.s32.totalorder %s41, 0
      %p271 = por %p269, %p270
      %p272 = scmp.ne.s32.totalorder %s258, %s259
      %p273 = scmp.eq.s32.totalorder %s42, 7
      %p274 = por %p272, %p273
      %p276 = scmp.ne.s32.totalorder %s259, %s275
      %p277 = scmp.eq.s32.totalorder %s42, 0
      %p278 = por %p276, %p277
      %s279 = ssub.s32 %s43, %s55
      %p280 = scmp.eq.s32.totalorder %s279, 0
      %s282 = sadd.s32 %s281, 1
      %s283 = scalar_select %p280, %s281, %s282
      %p286 = pneg %p280
      %p287 = scmp.eq.s32.totalorder %s36, 7
      %p288 = por %p286, %p287
      %p289 = scmp.ne.s32.totalorder %s281, %s284
      %p290 = scmp.eq.s32.totalorder %s36, 0
      %p291 = por %p289, %p290
      %p292 = scmp.ne.s32.totalorder %s281, %s284
      %p293 = scmp.eq.s32.totalorder %s41, 7
      %p294 = por %p292, %p293
      %p295 = scmp.ne.s32.totalorder %s284, %s285
      %p296 = scmp.eq.s32.totalorder %s41, 0
      %p297 = por %p295, %p296
      %p298 = scmp.ne.s32.totalorder %s284, %s285
      %p299 = scmp.eq.s32.totalorder %s42, 7
      %p300 = por %p298, %p299
      %p302 = scmp.ne.s32.totalorder %s285, %s301
      %p303 = scmp.eq.s32.totalorder %s42, 0
      %p304 = por %p302, %p303
      %s305 = ssub.s32 %s43, %s55
      %p306 = scmp.eq.s32.totalorder %s305, 0
      %s308 = sadd.s32 %s307, 1
      %s309 = scalar_select %p306, %s307, %s308
      %p312 = pneg %p306
      %p313 = scmp.eq.s32.totalorder %s36, 7
      %p314 = por %p312, %p313
      %p315 = scmp.ne.s32.totalorder %s307, %s310
      %p316 = scmp.eq.s32.totalorder %s36, 0
      %p317 = por %p315, %p316
      %p318 = scmp.ne.s32.totalorder %s307, %s310
      %p319 = scmp.eq.s32.totalorder %s41, 7
      %p320 = por %p318, %p319
      %p321 = scmp.ne.s32.totalorder %s310, %s311
      %p322 = scmp.eq.s32.totalorder %s41, 0
      %p323 = por %p321, %p322
      %p324 = scmp.ne.s32.totalorder %s310, %s311
      %p325 = scmp.eq.s32.totalorder %s42, 7
      %p326 = por %p324, %p325
      %p328 = scmp.ne.s32.totalorder %s311, %s327
      %p329 = scmp.eq.s32.totalorder %s42, 0
      %p330 = por %p328, %p329
      %s331 = ssub.s32 %s43, %s55
      %p332 = scmp.eq.s32.totalorder %s331, 0
      %s334 = sadd.s32 %s333, 1
      %s335 = scalar_select %p332, %s333, %s334
      %p338 = pneg %p332
      %p339 = scmp.eq.s32.totalorder %s36, 7
      %p340 = por %p338, %p339
      %p341 = scmp.ne.s32.totalorder %s333, %s336
      %p342 = scmp.eq.s32.totalorder %s36, 0
      %p343 = por %p341, %p342
      %p344 = scmp.ne.s32.totalorder %s333, %s336
      %p345 = scmp.eq.s32.totalorder %s41, 7
      %p346 = por %p344, %p345
      %p347 = scmp.ne.s32.totalorder %s336, %s337
      %p348 = scmp.eq.s32.totalorder %s41, 0
      %p349 = por %p347, %p348
      %p350 = scmp.ne.s32.totalorder %s336, %s337
      %p351 = scmp.eq.s32.totalorder %s42, 7
      %p352 = por %p350, %p351
      %p354 = scmp.ne.s32.totalorder %s337, %s353
      %p355 = scmp.eq.s32.totalorder %s42, 0
      %p356 = por %p354, %p355
      %p357 = scmp.le.s32.totalorder 1, %s36
      %p358 = scmp.lt.s32.totalorder %s36, 9
      %p359 = pnand %p357, %p358
      %p360 = pneg %p359
      // Predicated region
      $region9: #{tpu_custom_call.1} parent=5 // pred_check
        _
      $region10: #{tpu_custom_call.1} parent=5 // pred_check_branch
        %362 = sbr.rel (%p359) target = $region12
      $region11: #{tpu_custom_call.1} parent=5 // pred_region
        %s363 = ssub.s32 %s36, 1
        // Predicated region
        $region13: #{tpu_custom_call.1} parent=11 // pred_check
          %p364 = pneg %p175
        $region14: #{tpu_custom_call.1} parent=11 // pred_check_branch
          %366 = sbr.rel (%p364) target = $region16
        $region15: #{tpu_custom_call.1} parent=11 // pred_region
          %s368 = ssub.s32 1024, 1024
          %369 = vsyncadd [#allocation9], %s368
          %s370 = sshll.u32 [#allocation10], 4
          %s371 = int_to_ptr.vmem [resolvable:$true] %s370
          %376 = dma.hbm_to_vmem [thread:$0]  %s4, 1024, %s371, [#allocation9], 64, 64, 4
        $region16: #{tpu_custom_call.1} parent=11 // pred_fallthru
          _
        // Predicated region
        $region17: #{tpu_custom_call.1} parent=11 // pred_check
          %p377 = pneg %p196
        $region18: #{tpu_custom_call.1} parent=11 // pred_check_branch
          %379 = sbr.rel (%p377) target = $region20
        $region19: #{tpu_custom_call.1} parent=11 // pred_region
          _
        $region20: #{tpu_custom_call.1} parent=11 // pred_fallthru
          _
        // Predicated region
        $region21: #{tpu_custom_call.1} parent=11 // pred_check
          %p380 = pneg %p217
        $region22: #{tpu_custom_call.1} parent=11 // pred_check_branch
          %382 = sbr.rel (%p380) target = $region24
        $region23: #{tpu_custom_call.1} parent=11 // pred_region
          _
        $region24: #{tpu_custom_call.1} parent=11 // pred_fallthru
          _
      $region12: #{tpu_custom_call.1} parent=5 // pred_fallthru
        _
      %p383 = scmp.lt.s32.totalorder %s36, 8
      // Predicated region
      $region25: #{tpu_custom_call.1} parent=5 // pred_check
        %p384 = pneg %p383
      $region26: #{tpu_custom_call.1} parent=5 // pred_check_branch
        %386 = sbr.rel (%p384) target = $region28
      $region27: #{tpu_custom_call.1} parent=5 // pred_region
        // Predicated region
        $region29: #{tpu_custom_call.1} parent=27 // pred_check
          %p387 = pneg %p70
        $region30: #{tpu_custom_call.1} parent=27 // pred_check_branch
          %389 = sbr.rel (%p387) target = $region32
        $region31: #{tpu_custom_call.1} parent=27 // pred_region
          %s390 = sand.u32 %s60, 1
          %s391 = scalar_lea.sflag [#allocation3], %s390
          %s392 = sand.u32 %s60, 1
          %s393 = smul.addr %s392, 8
          %s394 = scalar_lea.vmem [#allocation2], %s393
          %s396 = ssub.s32 128, 128
          %397 = vsyncadd %s391, %s396
          %s398 = smul.addr %s44, 2
          %s399 = sadd.s32 %s43, %s398
          %s400 = smul.addr %s399, 128
          %s401 = scalar_lea.hbm %s0, %s400
          %s403 = sshll.u32 %s394, 4
          %s404 = int_to_ptr.vmem [resolvable:$true] %s403
          %406 = dma.hbm_to_vmem [thread:$0]  %s401, 128, %s404, %s391
        $region32: #{tpu_custom_call.1} parent=27 // pred_fallthru
          _
        // Predicated region
        $region33: #{tpu_custom_call.1} parent=27 // pred_check
          %p407 = pneg %p96
        $region34: #{tpu_custom_call.1} parent=27 // pred_check_branch
          %409 = sbr.rel (%p407) target = $region36
        $region35: #{tpu_custom_call.1} parent=27 // pred_region
          %s410 = sand.u32 %s36, 1
          %s411 = scalar_lea.sflag [#allocation6], %s410
          %s412 = sand.u32 %s86, 1
          %s413 = smul.addr %s412, 8
          %s414 = scalar_lea.vmem [#allocation5], %s413
          %s416 = ssub.s32 128, 128
          %417 = vsyncadd %s411, %s416
          %s418 = smul.addr %s43, 128
          %s419 = scalar_lea.hbm %s1, %s418
          %s421 = sshll.u32 %s414, 4
          %s422 = int_to_ptr.vmem [resolvable:$true] %s421
          %424 = dma.hbm_to_vmem [thread:$0]  %s419, 128, %s422, %s411
        $region36: #{tpu_custom_call.1} parent=27 // pred_fallthru
          _
        // Predicated region
        $region37: #{tpu_custom_call.1} parent=27 // pred_check
          %p425 = pneg %p122
        $region38: #{tpu_custom_call.1} parent=27 // pred_check_branch
          %427 = sbr.rel (%p425) target = $region40
        $region39: #{tpu_custom_call.1} parent=27 // pred_region
          %s428 = sand.u32 %s36, 1
          %s429 = scalar_lea.sflag [#allocation6], %s428
          %s430 = sand.u32 %s112, 1
          %s431 = smul.addr %s430, 8
          %s432 = scalar_lea.vmem [#allocation7], %s431
          %s434 = ssub.s32 128, 128
          %435 = vsyncadd %s429, %s434
          %s436 = smul.addr %s43, 128
          %s437 = scalar_lea.hbm %s2, %s436
          %s439 = sshll.u32 %s432, 4
          %s440 = int_to_ptr.vmem [resolvable:$true] %s439
          %442 = dma.hbm_to_vmem [thread:$0]  %s437, 128, %s440, %s429
        $region40: #{tpu_custom_call.1} parent=27 // pred_fallthru
          _
        // Predicated region
        $region41: #{tpu_custom_call.1} parent=27 // pred_check
          %p443 = pneg %p148
        $region42: #{tpu_custom_call.1} parent=27 // pred_check_branch
          %445 = sbr.rel (%p443) target = $region44
        $region43: #{tpu_custom_call.1} parent=27 // pred_region
          %s446 = sand.u32 %s36, 1
          %s447 = scalar_lea.sflag [#allocation9], %s446
          %s448 = sand.u32 %s138, 1
          %s449 = smul.addr %s448, 8
          %s450 = scalar_lea.vmem [#allocation8], %s449
          %s452 = ssub.s32 128, 128
          %453 = vsyncadd %s447, %s452
          %s454 = smul.addr %s43, 128
          %s455 = scalar_lea.hbm %s3, %s454
          %s457 = sshll.u32 %s450, 4
          %s458 = int_to_ptr.vmem [resolvable:$true] %s457
          %460 = dma.hbm_to_vmem [thread:$0]  %s455, 128, %s458, %s447
        $region44: #{tpu_custom_call.1} parent=27 // pred_fallthru
          _
      $region28: #{tpu_custom_call.1} parent=5 // pred_fallthru
        _
      %p461 = scmp.le.s32.totalorder 1, %s36
      %p462 = scmp.lt.s32.totalorder %s36, 9
      %p463 = pnand %p461, %p462
      %p464 = pneg %p463
      // Predicated region
      $region45: #{tpu_custom_call.1} parent=5 // pred_check
        _
      $region46: #{tpu_custom_call.1} parent=5 // pred_check_branch
        %466 = sbr.rel (%p463) target = $region48
      $region47: #{tpu_custom_call.1} parent=5 // pred_region
        %s467 = ssub.s32 %s36, 1
        %s468 = sand.u32 %s63, 1
        %s469 = scalar_lea.sflag [#allocation3], %s468
        %s470 = sand.u32 %s63, 1
        %s471 = smul.addr %s470, 8
        %s472 = scalar_lea.vmem [#allocation2], %s471
        // Predicated region
        $region49: #{tpu_custom_call.1} parent=47 // pred_check
          %p473 = pneg %p76
        $region50: #{tpu_custom_call.1} parent=47 // pred_check_branch
          %475 = sbr.rel (%p473) target = $region52
        $region51: #{tpu_custom_call.1} parent=47 // pred_region
          %476 = dma.done %s469, 128
        $region52: #{tpu_custom_call.1} parent=47 // pred_fallthru
          _
        %s477 = sand.u32 %s41, 1
        %s478 = scalar_lea.sflag [#allocation6], %s477
        %s479 = sand.u32 %s89, 1
        %s480 = smul.addr %s479, 8
        %s481 = scalar_lea.vmem [#allocation5], %s480
        // Predicated region
        $region53: #{tpu_custom_call.1} parent=47 // pred_check
          %p482 = pneg %p102
        $region54: #{tpu_custom_call.1} parent=47 // pred_check_branch
          %484 = sbr.rel (%p482) target = $region56
        $region55: #{tpu_custom_call.1} parent=47 // pred_region
          %485 = dma.done %s478, 128
        $region56: #{tpu_custom_call.1} parent=47 // pred_fallthru
          _
        %s486 = sand.u32 %s41, 1
        %s487 = scalar_lea.sflag [#allocation6], %s486
        %s488 = sand.u32 %s115, 1
        %s489 = smul.addr %s488, 8
        %s490 = scalar_lea.vmem [#allocation7], %s489
        // Predicated region
        $region57: #{tpu_custom_call.1} parent=47 // pred_check
          %p491 = pneg %p128
        $region58: #{tpu_custom_call.1} parent=47 // pred_check_branch
          %493 = sbr.rel (%p491) target = $region60
        $region59: #{tpu_custom_call.1} parent=47 // pred_region
          %494 = dma.done %s487, 128
        $region60: #{tpu_custom_call.1} parent=47 // pred_fallthru
          _
        %s495 = sand.u32 %s41, 1
        %s496 = scalar_lea.sflag [#allocation9], %s495
        %s497 = sand.u32 %s141, 1
        %s498 = smul.addr %s497, 8
        %s499 = scalar_lea.vmem [#allocation8], %s498
        // Predicated region
        $region61: #{tpu_custom_call.1} parent=47 // pred_check
          %p500 = pneg %p154
        $region62: #{tpu_custom_call.1} parent=47 // pred_check_branch
          %502 = sbr.rel (%p500) target = $region64
        $region63: #{tpu_custom_call.1} parent=47 // pred_region
          %503 = dma.done %s496, 128
        $region64: #{tpu_custom_call.1} parent=47 // pred_fallthru
          _
        // Predicated region
        $region65: #{tpu_custom_call.1} parent=47 // pred_check
          %p504 = pneg %p175
        $region66: #{tpu_custom_call.1} parent=47 // pred_check_branch
          %506 = sbr.rel (%p504) target = $region68
        $region67: #{tpu_custom_call.1} parent=47 // pred_region
          %507 = dma.done [#allocation9], 1024
        $region68: #{tpu_custom_call.1} parent=47 // pred_fallthru
          _
        %s508 = sand.u32 %s63, 1
        %s509 = scalar_lea.sflag [#allocation3], %s508
        %s510 = sand.u32 %s63, 1
        %s511 = smul.addr %s510, 8
        %s512 = scalar_lea.vmem [#allocation2], %s511
        %p513 = pneg %p76
        %p514 = pneg %p73
        %s515 = sand.u32 %s41, 1
        %s516 = scalar_lea.sflag [#allocation6], %s515
        %s517 = sand.u32 %s89, 1
        %s518 = smul.addr %s517, 8
        %s519 = scalar_lea.vmem [#allocation5], %s518
        %p520 = pneg %p102
        %p521 = pneg %p99
        %s522 = sand.u32 %s41, 1
        %s523 = scalar_lea.sflag [#allocation6], %s522
        %s524 = sand.u32 %s115, 1
        %s525 = smul.addr %s524, 8
        %s526 = scalar_lea.vmem [#allocation7], %s525
        %p527 = pneg %p128
        %p528 = pneg %p125
        %s529 = sand.u32 %s41, 1
        %s530 = scalar_lea.sflag [#allocation9], %s529
        %s531 = sand.u32 %s141, 1
        %s532 = smul.addr %s531, 8
        %s533 = scalar_lea.vmem [#allocation8], %s532
        %p534 = pneg %p154
        %p535 = pneg %p151
        %p536 = pneg %p175
        %p537 = pneg %p172
        %p538 = pneg %p196
        %p539 = pneg %p193
        %p540 = pneg %p217
        %p541 = pneg %p214
        %p542 = pneg %p245
        %p543 = pneg %p242
        %s544 = sand.u32 %s232, 1
        %s545 = scalar_lea.sflag [#allocation4], %s544
        %s546 = sand.u32 %s232, 1
        %s547 = smul.addr %s546, 8
        %s548 = scalar_lea.vmem [#allocation11], %s547
        %p549 = pneg %p271
        %p550 = pneg %p268
        %s551 = sand.u32 %s41, 1
        %s552 = scalar_lea.sflag [#allocation13], %s551
        %s553 = sand.u32 %s258, 1
        %s554 = smul.addr %s553, 8
        %s555 = scalar_lea.vmem [#allocation12], %s554
        %p556 = pneg %p297
        %p557 = pneg %p294
        %s558 = sand.u32 %s41, 1
        %s559 = scalar_lea.sflag [#allocation13], %s558
        %s560 = sand.u32 %s284, 1
        %s561 = smul.addr %s560, 8
        %s562 = scalar_lea.vmem [#allocation14], %s561
        %p563 = pneg %p323
        %p564 = pneg %p320
        %s565 = sand.u32 %s41, 1
        %s566 = scalar_lea.sflag [#allocation16], %s565
        %s567 = sand.u32 %s310, 1
        %s568 = smul.addr %s567, 8
        %s569 = scalar_lea.vmem [#allocation15], %s568
        %p570 = pneg %p349
        %p571 = pneg %p346
        %s572 = sand.u32 %s41, 1
        %s573 = scalar_lea.sflag [#allocation16], %s572
        %s574 = sand.u32 %s336, 1
        %s575 = smul.addr %s574, 8
        %s576 = scalar_lea.vmem [#allocation17], %s575
        %p578 = scmp.eq.s32.totalorder %s46, 0
        // Predicated region
        $region69: #{tpu_custom_call.1} parent=47 // pred_check
          %p579 = pneg %p578
        $region70: #{tpu_custom_call.1} parent=47 // pred_check_branch
          %581 = sbr.rel (%p579) target = $region72
        $region71: #{tpu_custom_call.1} parent=47 // pred_region
          %v582 = vld [vmem:[%s481] sm:$0xff]
          %583 = vst [vmem:[%s569] sm:$0xff] %v582
          %v584 = vld [vmem:[%s490] sm:$0xff]
          %585 = vst [vmem:[%s576] sm:$0xff] %v584
          %v586 = vld [vmem:[%s499] sm:$0xff]
          %587 = vst [vmem:[%s562] sm:$0xff] %v586
        $region72: #{tpu_custom_call.1} parent=47 // pred_fallthru
          _
        %v588 = vld [vmem:[%s472] sm:$0xff]
        %v589 = vld [vmem:[%s569] sm:$0xff]
        %v590 = vld [vmem:[%s5] sm:$0x1]
        %v591 = vlaneseq
        %v592 = vshrl.u32 %v591, 7
        %v593 = vsub.s32 0, %v592
        %v594 = vrot.slane %v590, %v593
        %v595 = vmul.f32 %v589, %v594
        %v596 = vadd.f32 %v595, %v588
        %v597 = vld [vmem:[%s576] sm:$0xff]
        %v598 = vld [vmem:[%s5 + $0x1] sm:$0x1]
        %v599 = vlaneseq
        %v600 = vshrl.u32 %v599, 7
        %v601 = vsub.s32 0, %v600
        %v602 = vrot.slane %v598, %v601
        %v603 = vmul.f32 %v597, %v602
        %v604 = vadd.f32 %v603, %v588
        %v605 = vsub.f32 %v596, %v604
        %v606 = vpack.c.bf16 %v605, %v605
        %v607 = vld [vmem:[#allocation10] sm:$0xf]
        %v608 = vld [vmem:[#allocation10 + $0x4] sm:$0xf]
        %v609 = vld [vmem:[#allocation10 + $0x8] sm:$0xf]
        %v610 = vld [vmem:[#allocation10 + $0xc] sm:$0xf]
        %v611 = vld [vmem:[#allocation10 + $0x10] sm:$0xf]
        %v612 = vld [vmem:[#allocation10 + $0x14] sm:$0xf]
        %v613 = vld [vmem:[#allocation10 + $0x18] sm:$0xf]
        %v614 = vld [vmem:[#allocation10 + $0x1c] sm:$0xf]
        %v615 = vld [vmem:[#allocation10 + $0x20] sm:$0xf]
        %v616 = vld [vmem:[#allocation10 + $0x24] sm:$0xf]
        %v617 = vld [vmem:[#allocation10 + $0x28] sm:$0xf]
        %v618 = vld [vmem:[#allocation10 + $0x2c] sm:$0xf]
        %v619 = vld [vmem:[#allocation10 + $0x30] sm:$0xf]
        %v620 = vld [vmem:[#allocation10 + $0x34] sm:$0xf]
        %v621 = vld [vmem:[#allocation10 + $0x38] sm:$0xf]
        %v622 = vld [vmem:[#allocation10 + $0x3c] sm:$0xf]
        %v623 = vld [vmem:[%s6] sm:$0x1]
        %v624 = vlaneseq
        %v625 = vshrl.u32 %v624, 7
        %v626 = vsub.s32 0, %v625
        %v627 = vrot.slane %v623, %v626
        %v644 = vunpack.c.l.b16 %v607
        %v645 = vunpack.c.l.b16 %v608
        %v646 = vunpack.c.l.b16 %v609
        %v647 = vunpack.c.l.b16 %v610
        %v648 = vunpack.c.l.b16 %v611
        %v649 = vunpack.c.l.b16 %v612
        %v650 = vunpack.c.l.b16 %v613
        %v651 = vunpack.c.l.b16 %v614
        %v652 = vunpack.c.l.b16 %v615
        %v653 = vunpack.c.l.b16 %v616
        %v654 = vunpack.c.l.b16 %v617
        %v655 = vunpack.c.l.b16 %v618
        %v656 = vunpack.c.l.b16 %v619
        %v657 = vunpack.c.l.b16 %v620
        %v658 = vunpack.c.l.b16 %v621
        %v659 = vunpack.c.l.b16 %v622
        %v660 = vpack.c.b16 %v645, %v644
        %v661 = vpack.c.b16 %v647, %v646
        %v662 = vpack.c.b16 %v649, %v648
        %v663 = vpack.c.b16 %v651, %v650
        %v664 = vpack.c.b16 %v653, %v652
        %v665 = vpack.c.b16 %v655, %v654
        %v666 = vpack.c.b16 %v657, %v656
        %v667 = vpack.c.b16 %v659, %v658
        %676 = vmatprep.subr.bf16.mxu0 0
        %677 = vmatpush1.bf16.msra.mxu0 %v667
        %678 = vmatprep.subr.bf16.mxu0 0
        %679 = vmatpush1.bf16.msra.mxu0 %v666
        %680 = vmatprep.subr.bf16.mxu0 0
        %681 = vmatpush1.bf16.msra.mxu0 %v665
        %682 = vmatprep.subr.bf16.mxu0 0
        %683 = vmatpush1.bf16.msra.mxu0 %v664
        %684 = vmatprep.subr.bf16.mxu0 0
        %685 = vmatpush1.bf16.msra.mxu0 %v663
        %686 = vmatprep.subr.bf16.mxu0 0
        %687 = vmatpush1.bf16.msra.mxu0 %v662
        %688 = vmatprep.subr.bf16.mxu0 0
        %689 = vmatpush1.bf16.msra.mxu0 %v661
        %690 = vmatprep.subr.bf16.mxu0 0
        %691 = vmatpush1.bf16.msra.mxu0 %v660
        %692 = vmatprep.subr.bf16.mxu0 0
        %693 = vmatpush2.bf16.msra.mxu0 0
        %694 = vmatprep.subr.bf16.mxu0 0
        %695 = vmatpush2.bf16.msra.mxu0 0
        %696 = vmatprep.subr.bf16.mxu0 0
        %697 = vmatpush2.bf16.msra.mxu0 0
        %698 = vmatprep.subr.bf16.mxu0 0
        %699 = vmatpush2.bf16.msra.mxu0 0
        %700 = vmatprep.subr.bf16.mxu0 0
        %701 = vmatpush2.bf16.msra.mxu0 0
        %702 = vmatprep.subr.bf16.mxu0 0
        %703 = vmatpush2.bf16.msra.mxu0 0
        %704 = vmatprep.subr.bf16.mxu0 0
        %705 = vmatpush2.bf16.msra.mxu0 0
        %706 = vmatprep.subr.bf16.mxu0 0
        %707 = vmatpush2.bf16.msra.mxu0 0
        %708 = vmatprep.mubr.bf16.mxu0 0
        %709 = vmatmul.mubr.bf16.gmra.mxu0 %v606
        %v710 = vpop.f32.mrf.mxu0
        %v711 = vadd.f32 %v627, %v710
        %v712 = vpop.f32.mrf.mxu0
        %v713 = vpop.f32.mrf.mxu0
        %v714 = vpop.f32.mrf.mxu0
        %715 = vdwg.mxu0
        %v716 = vld [vmem:[%s562] sm:$0xff]
        %v717 = vsub.f32 %v711, %v716
        %vm718 = vcmp.gt.f32.partialorder %v717, 1.0
        %v719 = vsel %vm718, 1.0, 0.0
        %v720 = vld [vmem:[%s6 + $0x1] sm:$0x1]
        %v721 = vlaneseq
        %v722 = vshrl.u32 %v721, 7
        %v723 = vsub.s32 0, %v722
        %v724 = vrot.slane %v720, %v723
        %v725 = vmul.f32 %v716, %v724
        %v726 = vld [vmem:[%s6 + $0x2] sm:$0x1]
        %v727 = vlaneseq
        %v728 = vshrl.u32 %v727, 7
        %v729 = vsub.s32 0, %v728
        %v730 = vrot.slane %v726, %v729
        %v731 = vmul.f32 %v719, %v730
        %v732 = vadd.f32 %v725, %v731
        %733 = vst [vmem:[%s548] sm:$0xff] %v719
        %734 = vst [vmem:[%s555] sm:$0xff] %v717
        %735 = vst [vmem:[%s562] sm:$0xff] %v732
        %736 = vst [vmem:[%s569] sm:$0xff] %v596
        %737 = vst [vmem:[%s576] sm:$0xff] %v604
        %s738 = sand.u32 %s232, 1
        %s739 = scalar_lea.sflag [#allocation4], %s738
        %s740 = sand.u32 %s232, 1
        %s741 = smul.addr %s740, 8
        %s742 = scalar_lea.vmem [#allocation11], %s741
        %s743 = sand.u32 %s41, 1
        %s744 = scalar_lea.sflag [#allocation13], %s743
        %s745 = sand.u32 %s258, 1
        %s746 = smul.addr %s745, 8
        %s747 = scalar_lea.vmem [#allocation12], %s746
        %s748 = sand.u32 %s41, 1
        %s749 = scalar_lea.sflag [#allocation13], %s748
        %s750 = sand.u32 %s284, 1
        %s751 = smul.addr %s750, 8
        %s752 = scalar_lea.vmem [#allocation14], %s751
        %s753 = sand.u32 %s41, 1
        %s754 = scalar_lea.sflag [#allocation16], %s753
        %s755 = sand.u32 %s310, 1
        %s756 = smul.addr %s755, 8
        %s757 = scalar_lea.vmem [#allocation15], %s756
        %s758 = sand.u32 %s41, 1
        %s759 = scalar_lea.sflag [#allocation16], %s758
        %s760 = sand.u32 %s336, 1
        %s761 = smul.addr %s760, 8
        %s762 = scalar_lea.vmem [#allocation17], %s761
        // Predicated region
        $region73: #{tpu_custom_call.1} parent=47 // pred_check
          %p763 = pneg %p242
        $region74: #{tpu_custom_call.1} parent=47 // pred_check_branch
          %765 = sbr.rel (%p763) target = $region76
        $region75: #{tpu_custom_call.1} parent=47 // pred_region
          %s767 = ssub.s32 128, 128
          %768 = vsyncadd %s739, %s767
          %s769 = smul.addr %s46, 2
          %s770 = sadd.s32 %s45, %s769
          %s771 = smul.addr %s770, 128
          %s772 = scalar_lea.hbm %s7, %s771
          %s774 = sshll.u32 %s742, 4
          %s775 = int_to_ptr.vmem [resolvable:$true] %s774
          %777 = dma.vmem_to_hbm [thread:$0]  %s775, 128, %s772, %s739
        $region76: #{tpu_custom_call.1} parent=47 // pred_fallthru
          _
        // Predicated region
        $region77: #{tpu_custom_call.1} parent=47 // pred_check
          %p778 = pneg %p268
        $region78: #{tpu_custom_call.1} parent=47 // pred_check_branch
          %780 = sbr.rel (%p778) target = $region80
        $region79: #{tpu_custom_call.1} parent=47 // pred_region
          %s782 = ssub.s32 128, 128
          %783 = vsyncadd %s744, %s782
          %s784 = smul.addr %s45, 128
          %s785 = scalar_lea.hbm %s8, %s784
          %s787 = sshll.u32 %s747, 4
          %s788 = int_to_ptr.vmem [resolvable:$true] %s787
          %790 = dma.vmem_to_hbm [thread:$0]  %s788, 128, %s785, %s744
        $region80: #{tpu_custom_call.1} parent=47 // pred_fallthru
          _
        // Predicated region
        $region81: #{tpu_custom_call.1} parent=47 // pred_check
          %p791 = pneg %p294
        $region82: #{tpu_custom_call.1} parent=47 // pred_check_branch
          %793 = sbr.rel (%p791) target = $region84
        $region83: #{tpu_custom_call.1} parent=47 // pred_region
          %s795 = ssub.s32 128, 128
          %796 = vsyncadd %s749, %s795
          %s797 = smul.addr %s45, 128
          %s798 = scalar_lea.hbm %s9, %s797
          %s800 = sshll.u32 %s752, 4
          %s801 = int_to_ptr.vmem [resolvable:$true] %s800
          %803 = dma.vmem_to_hbm [thread:$0]  %s801, 128, %s798, %s749
        $region84: #{tpu_custom_call.1} parent=47 // pred_fallthru
          _
        // Predicated region
        $region85: #{tpu_custom_call.1} parent=47 // pred_check
          %p804 = pneg %p320
        $region86: #{tpu_custom_call.1} parent=47 // pred_check_branch
          %806 = sbr.rel (%p804) target = $region88
        $region87: #{tpu_custom_call.1} parent=47 // pred_region
          %s808 = ssub.s32 128, 128
          %809 = vsyncadd %s754, %s808
          %s810 = smul.addr %s45, 128
          %s811 = scalar_lea.hbm %s10, %s810
          %s813 = sshll.u32 %s757, 4
          %s814 = int_to_ptr.vmem [resolvable:$true] %s813
          %816 = dma.vmem_to_hbm [thread:$0]  %s814, 128, %s811, %s754
        $region88: #{tpu_custom_call.1} parent=47 // pred_fallthru
          _
        // Predicated region
        $region89: #{tpu_custom_call.1} parent=47 // pred_check
          %p817 = pneg %p346
        $region90: #{tpu_custom_call.1} parent=47 // pred_check_branch
          %819 = sbr.rel (%p817) target = $region92
        $region91: #{tpu_custom_call.1} parent=47 // pred_region
          %s821 = ssub.s32 128, 128
          %822 = vsyncadd %s759, %s821
          %s823 = smul.addr %s45, 128
          %s824 = scalar_lea.hbm %s11, %s823
          %s826 = sshll.u32 %s762, 4
          %s827 = int_to_ptr.vmem [resolvable:$true] %s826
          %829 = dma.vmem_to_hbm [thread:$0]  %s827, 128, %s824, %s759
        $region92: #{tpu_custom_call.1} parent=47 // pred_fallthru
          _
      $region48: #{tpu_custom_call.1} parent=5 // pred_fallthru
        _
      %p830 = scmp.le.s32.totalorder 2, %s36
      // Predicated region
      $region93: #{tpu_custom_call.1} parent=5 // pred_check
        %p831 = pneg %p830
      $region94: #{tpu_custom_call.1} parent=5 // pred_check_branch
        %833 = sbr.rel (%p831) target = $region96
      $region95: #{tpu_custom_call.1} parent=5 // pred_region
        %s834 = ssub.s32 %s36, 2
        // Predicated region
        $region97: #{tpu_custom_call.1} parent=95 // pred_check
          %p835 = pneg %p248
        $region98: #{tpu_custom_call.1} parent=95 // pred_check_branch
          %837 = sbr.rel (%p835) target = $region100
        $region99: #{tpu_custom_call.1} parent=95 // pred_region
          %s838 = sand.u32 %s233, 1
          %s839 = scalar_lea.sflag [#allocation4], %s838
          %s840 = sand.u32 %s233, 1
          %s841 = smul.addr %s840, 8
          %s842 = scalar_lea.vmem [#allocation11], %s841
          %843 = dma.done %s839, 128
        $region100: #{tpu_custom_call.1} parent=95 // pred_fallthru
          _
        // Predicated region
        $region101: #{tpu_custom_call.1} parent=95 // pred_check
          %p844 = pneg %p274
        $region102: #{tpu_custom_call.1} parent=95 // pred_check_branch
          %846 = sbr.rel (%p844) target = $region104
        $region103: #{tpu_custom_call.1} parent=95 // pred_region
          %s847 = sand.u32 %s42, 1
          %s848 = scalar_lea.sflag [#allocation13], %s847
          %s849 = sand.u32 %s259, 1
          %s850 = smul.addr %s849, 8
          %s851 = scalar_lea.vmem [#allocation12], %s850
          %852 = dma.done %s848, 128
        $region104: #{tpu_custom_call.1} parent=95 // pred_fallthru
          _
        // Predicated region
        $region105: #{tpu_custom_call.1} parent=95 // pred_check
          %p853 = pneg %p300
        $region106: #{tpu_custom_call.1} parent=95 // pred_check_branch
          %855 = sbr.rel (%p853) target = $region108
        $region107: #{tpu_custom_call.1} parent=95 // pred_region
          %s856 = sand.u32 %s42, 1
          %s857 = scalar_lea.sflag [#allocation13], %s856
          %s858 = sand.u32 %s285, 1
          %s859 = smul.addr %s858, 8
          %s860 = scalar_lea.vmem [#allocation14], %s859
          %861 = dma.done %s857, 128
        $region108: #{tpu_custom_call.1} parent=95 // pred_fallthru
          _
        // Predicated region
        $region109: #{tpu_custom_call.1} parent=95 // pred_check
          %p862 = pneg %p326
        $region110: #{tpu_custom_call.1} parent=95 // pred_check_branch
          %864 = sbr.rel (%p862) target = $region112
        $region111: #{tpu_custom_call.1} parent=95 // pred_region
          %s865 = sand.u32 %s42, 1
          %s866 = scalar_lea.sflag [#allocation16], %s865
          %s867 = sand.u32 %s311, 1
          %s868 = smul.addr %s867, 8
          %s869 = scalar_lea.vmem [#allocation15], %s868
          %870 = dma.done %s866, 128
        $region112: #{tpu_custom_call.1} parent=95 // pred_fallthru
          _
        // Predicated region
        $region113: #{tpu_custom_call.1} parent=95 // pred_check
          %p871 = pneg %p352
        $region114: #{tpu_custom_call.1} parent=95 // pred_check_branch
          %873 = sbr.rel (%p871) target = $region116
        $region115: #{tpu_custom_call.1} parent=95 // pred_region
          %s874 = sand.u32 %s42, 1
          %s875 = scalar_lea.sflag [#allocation16], %s874
          %s876 = sand.u32 %s337, 1
          %s877 = smul.addr %s876, 8
          %s878 = scalar_lea.vmem [#allocation17], %s877
          %879 = dma.done %s875, 128
        $region116: #{tpu_custom_call.1} parent=95 // pred_fallthru
          _
      $region96: #{tpu_custom_call.1} parent=5 // pred_fallthru
        _
    $region6: #{tpu_custom_call.1} parent=1 // loop_footer
      %s40 = sadd.s32 1, %s36
    $region7: #{tpu_custom_call.1} parent=1 // loop_footer_branch
      %35 = sbr.rel target = $region3
    $region8: #{tpu_custom_call.1} parent=1 // loop_exit
      _
    %880 = vsyncpa [#allocation3], 1
    %s881 = scalar_lea.sflag [#allocation3], 1
    %882 = vsyncpa %s881, 1
    %883 = vsyncpa [#allocation6], 1
    %s884 = scalar_lea.sflag [#allocation6], 1
    %885 = vsyncpa %s884, 1
    %886 = vsyncpa [#allocation9], 1
    %s887 = scalar_lea.sflag [#allocation9], 1
    %888 = vsyncpa %s887, 1
    %889 = vsyncpa [#allocation4], 1
    %s890 = scalar_lea.sflag [#allocation4], 1
    %891 = vsyncpa %s890, 1
    %892 = vsyncpa [#allocation13], 1
    %s893 = scalar_lea.sflag [#allocation13], 1
    %894 = vsyncpa %s893, 1
    %895 = vsyncpa [#allocation16], 1
    %s896 = scalar_lea.sflag [#allocation16], 1
    %897 = vsyncpa %s896, 1

</llo_original>
